<compile_context>
chip_gen: v7x
topology: tpu7x:2x2x1
jax: 0.10.0
libtpu: 0.0.40
codegen_flags: <defaults>
</compile_context>

<pallas_src>
import jax
import jax.numpy as jnp
from jax.experimental import pallas as pl
from jax.experimental.pallas import tpu as pltpu


def _temporal_attention_kernel(x_ref, w_all_ref, b_all_ref, w_c_ref, b_c_ref,
                               o_ref, k_hist, v_hist):
    # x_ref: (C, Nt) channel-major pixels of frame t (pixel tile p; the frame
    # dim is squeezed by the BlockSpec).
    c8p = k_hist.shape[1]          # padded q/k channel group (multiple of 8)
    c2 = v_hist.shape[1]           # value channels (= C // 2)
    t = pl.program_id(1)

    # New pixel tile starts at frame 0: reset the temporal history to the
    # zero-padding the reference applies for frames t-1, t-2 < 0.
    @pl.when(t == 0)
    def _():
        k_hist[...] = jnp.zeros_like(k_hist)
        v_hist[...] = jnp.zeros_like(v_hist)

    # Fused q/k/v projection: single (2*c8p + c2, C) @ (C, Nt) MXU matmul,
    # pixels stay in the lane dimension.
    qkv = (jnp.dot(w_all_ref[...], x_ref[...],
                   preferred_element_type=jnp.float32) + b_all_ref[...])
    q = qkv[:c8p, :]                          # padded rows are exactly zero
    k_t = qkv[c8p:2 * c8p, :]
    v_t = jnp.maximum(qkv[2 * c8p:, :], 0.0)  # relu(value conv)

    # History slots hold frames t-1 and t-2 in parity order.  The temporal
    # softmax + weighted value sum below is permutation invariant, so we never
    # need to know which slot is which — only that score s_X pairs with v_X.
    k_a = k_hist[0]
    v_a = v_hist[0]
    k_b = k_hist[1]
    v_b = v_hist[1]

    # Per-pixel temporal attention scores over the 3-frame window
    # (dot over the query/key channels -> cross-sublane reduce on the XLU).
    s_t = jnp.sum(q * k_t, axis=0, keepdims=True)   # frame t       (1, Nt)
    s_a = jnp.sum(q * k_a, axis=0, keepdims=True)   # history slot 0
    s_b = jnp.sum(q * k_b, axis=0, keepdims=True)   # history slot 1

    # Softmax over the 3 temporal positions, per pixel.
    m = jnp.maximum(jnp.maximum(s_a, s_b), s_t)
    e_t = jnp.exp(s_t - m)
    e_a = jnp.exp(s_a - m)
    e_b = jnp.exp(s_b - m)
    inv = 1.0 / (e_t + e_a + e_b)                   # one divide per pixel

    # Attention-weighted temporal sum of values ((1, Nt) broadcast over C2).
    ctx = (e_t * inv) * v_t + (e_a * inv) * v_a + (e_b * inv) * v_b   # (C2, Nt)

    # Combiner 1x1 conv.
    comb = (jnp.dot(w_c_ref[...], ctx, preferred_element_type=jnp.float32)
            + b_c_ref[...])

    # torch.cat((combiner_out, v), dim=channel): two contiguous sublane
    # stores, lane-dense over Nt, no in-kernel concatenate.
    o_ref[pl.ds(0, c2), :] = comb
    o_ref[pl.ds(c2, c2), :] = v_t

    # Overwrite the slot holding frame t-2 (it falls out of the window).
    # Frame f lives in slot f % 2, so parity of t selects the slot; static
    # indices only, no slot-to-slot copies.
    parity = t % 2

    @pl.when(parity == 0)
    def _():
        k_hist[0] = k_t
        v_hist[0] = v_t

    @pl.when(parity == 1)
    def _():
        k_hist[1] = k_t
        v_hist[1] = v_t


def temporal_attention_head(x_nchw, params, *, max_pixel_tile=2048):
    """Pallas implementation of TemporalAttentionHead.forward.

    x_nchw: (T, C, H, W) float32, T = number of frames (time along batch dim).
    params: (wq, bq, wk, bk, wv, bv, wc, bc) with PyTorch Conv2d shapes
            (Cout, Cin, 1, 1) for weights and (Cout,) for biases.
    returns: (T, C, H, W) float32  == cat(combiner(ctx), relu(value_conv(x))).
    """
    T, C, H, W = x_nchw.shape
    assert C % 8 == 0, "input_channels must be divisible by 8"
    C8, C2 = C // 8, C // 2
    N = H * W

    wq, bq, wk, bk, wv, bv, wc, bc = params

    # Fuse q/k/v 1x1-conv weights into one channel-major matrix; pad the q/k
    # groups to a sublane multiple so all in-kernel slices are 8-aligned
    # (padded rows have zero weight and zero bias -> contribute exactly 0).
    C8p = ((C8 + 7) // 8) * 8
    zpad_w = jnp.zeros((C8p - C8, C), jnp.float32)
    zpad_b = jnp.zeros((C8p - C8,), jnp.float32)
    w_all = jnp.concatenate([wq.reshape(C8, C), zpad_w,
                             wk.reshape(C8, C), zpad_w,
                             wv.reshape(C2, C)], axis=0)            # (2*C8p+C2, C)
    b_all = jnp.concatenate([bq, zpad_b, bk, zpad_b, bv]).reshape(-1, 1)
    w_c = wc.reshape(C2, C2)
    b_c2 = bc.reshape(C2, 1)
    c_all = 2 * C8p + C2

    # NCHW -> (T, C, N) is a pure reshape: channel-major, pixels in lanes.
    x_flat = x_nchw.reshape(T, C, N)

    # Pixel tile: largest multiple-of-128 divisor of N (bounded), else full N.
    nt = N
    if N % 128 == 0:
        nt = 128
        cand = 128
        while cand <= min(N, max_pixel_tile):
            if N % cand == 0:
                nt = cand
            cand += 128
    num_pixel_tiles = N // nt

    def wspec(shape):
        return pl.BlockSpec(shape, lambda p, t: (0,) * len(shape))

    out_flat = pl.pallas_call(
        _temporal_attention_kernel,
        out_shape=jax.ShapeDtypeStruct((T, C, N), jnp.float32),
        grid_spec=pltpu.PrefetchScalarGridSpec(
            num_scalar_prefetch=0,
            # pixel tiles outer (parallel), frames inner (sequential history)
            grid=(num_pixel_tiles, T),
            in_specs=[
                pl.BlockSpec((None, C, nt), lambda p, t: (t, 0, p)),  # x[t] tile
                wspec((c_all, C)), wspec((c_all, 1)),                 # fused qkv w,b
                wspec((C2, C2)), wspec((C2, 1)),                      # combiner w,b
            ],
            out_specs=pl.BlockSpec((None, C, nt), lambda p, t: (t, 0, p)),
            scratch_shapes=[
                pltpu.VMEM((2, C8p, nt), jnp.float32),   # k history (ping-pong)
                pltpu.VMEM((2, C2, nt), jnp.float32),    # v history (ping-pong)
            ],
        ),
        compiler_params=pltpu.CompilerParams(
            dimension_semantics=("parallel", "arbitrary")),
    )(x_flat, w_all, b_all, w_c, b_c2)

    return out_flat.reshape(T, C, H, W)


def _reference_forward(x, params):
    """Pure-JAX reference mirroring the PyTorch forward exactly."""
    T, C, H, W = x.shape
    C8, C2 = C // 8, C // 2
    wq, bq, wk, bk, wv, bv, wc, bc = params

    def conv1x1(y, w, b):
        cout = w.shape[0]
        return (jnp.einsum('tchw,oc->tohw', y, w.reshape(cout, -1))
                + b[None, :, None, None])

    q = conv1x1(x, wq, bq)                            # (T, C8, H, W)
    k = conv1x1(x, wk, bk)                            # (T, C8, H, W)
    v = jax.nn.relu(conv1x1(x, wv, bv))               # (T, C2, H, W)

    def precede(y):   # (T, c, H, W) -> (T, 3, c, H, W); [t, j] = y[t - (2 - j)] or 0
        z = jnp.zeros((1,) + y.shape[1:], y.dtype)
        y_m1 = jnp.concatenate([z, y[:-1]], axis=0)
        y_m2 = jnp.concatenate([z, z, y[:-2]], axis=0)
        return jnp.stack([y_m2, y_m1, y], axis=1)

    k3 = precede(k)                                   # (T, 3, C8, H, W)
    v3 = precede(v)                                   # (T, 3, C2, H, W)
    scores = jnp.einsum('tjchw,tchw->tjhw', k3, q)    # (T, 3, H, W)
    attn = jax.nn.softmax(scores, axis=1)             # softmax over the 3 frames
    ctx = jnp.einsum('tjhw,tjchw->tchw', attn, v3)    # (T, C2, H, W)
    comb = conv1x1(ctx, wc, bc)                       # (T, C2, H, W)
    return jnp.concatenate([comb, v], axis=1)         # (T, C, H, W)


def _init_params(key, C):
    C8, C2 = C // 8, C // 2
    ks = jax.random.split(key, 8)

    def w(k, cout, cin):
        return jax.random.normal(k, (cout, cin, 1, 1), jnp.float32) / jnp.sqrt(cin)

    def b(k, cout):
        return jax.random.normal(k, (cout,), jnp.float32) * 0.05

    return (w(ks[0], C8, C), b(ks[1], C8),
            w(ks[2], C8, C), b(ks[3], C8),
            w(ks[4], C2, C), b(ks[5], C2),
            w(ks[6], C2, C2), b(ks[7], C2))


if __name__ == "__main__":
    key = jax.random.PRNGKey(0)
    k_x, k_p = jax.random.split(key)

    T, C, H, W = 8, 32, 16, 16    # 8 frames, 32 channels (C must be divisible by 8)
    x = jax.random.normal(k_x, (T, C, H, W), jnp.float32)
    params = _init_params(k_p, C)

    out = temporal_attention_head(x, params)
    out = jax.block_until_ready(out)

    ref = _reference_forward(x, params)
    assert out.shape == (T, C, H, W), out.shape
    err = float(jnp.max(jnp.abs(out - ref)))
    assert jnp.allclose(out, ref, atol=5e-4, rtol=5e-4), err

    print("KERNEL_OK")
</pallas_src>

<mosaic_0001>
module attributes {stable_mosaic.version = 11 : i64} {
  func.func @_temporal_attention_kernel(%arg0: i32, %arg1: i32, %arg2: memref<1x32x256xf32, #tpu.memory_space<vmem>>, %arg3: memref<32x32xf32, #tpu.memory_space<vmem>>, %arg4: memref<32x1xf32, #tpu.memory_space<vmem>>, %arg5: memref<16x16xf32, #tpu.memory_space<vmem>>, %arg6: memref<16x1xf32, #tpu.memory_space<vmem>>, %arg7: memref<1x32x256xf32, #tpu.memory_space<vmem>>, %arg8: memref<2x8x256xf32, #tpu.memory_space<vmem>>, %arg9: memref<2x16x256xf32, #tpu.memory_space<vmem>>) attributes {dimension_semantics = [#tpu.dimension_semantics<parallel>, #tpu.dimension_semantics<arbitrary>], iteration_bounds = array<i64: 1, 8>, scalar_prefetch = 0 : i64, scratch_operands = 2 : i64, tpu.core_type = #tpu.core_type<tc>, window_params = [{transform_indices = @transform_0, window_bounds = array<i64: 1, 32, 256>}, {pipeline_mode = #tpu.pipeline_mode<synchronous>, transform_indices = @transform_1, window_bounds = array<i64: 32, 32>}, {pipeline_mode = #tpu.pipeline_mode<synchronous>, transform_indices = @transform_2, window_bounds = array<i64: 32, 1>}, {pipeline_mode = #tpu.pipeline_mode<synchronous>, transform_indices = @transform_3, window_bounds = array<i64: 16, 16>}, {pipeline_mode = #tpu.pipeline_mode<synchronous>, transform_indices = @transform_4, window_bounds = array<i64: 16, 1>}, {transform_indices = @transform_5, window_bounds = array<i64: 1, 32, 256>}]} {
    %c0_i32 = arith.constant 0 : i32
    %0 = arith.cmpi eq, %arg1, %c0_i32 : i32
    %1 = arith.extui %0 : i1 to i32
    %c0_i32_0 = arith.constant 0 : i32
    %2 = arith.cmpi ne, %1, %c0_i32_0 : i32
    scf.if %2 {
      %cst_41 = arith.constant 0.000000e+00 : f32
      %82 = vector.broadcast %cst_41 : f32 to vector<2x8x256xf32>
      %c0_42 = arith.constant 0 : index
      %c0_43 = arith.constant 0 : index
      %c0_44 = arith.constant 0 : index
      %83 = vector.load %arg8[%c0_42, %c0_43, %c0_44] : memref<2x8x256xf32, #tpu.memory_space<vmem>>, vector<2x8x256xf32>
      tpu.vector_store %arg8[%c0_42, %c0_43, %c0_44], %82 {strides = array<i32>} : memref<2x8x256xf32, #tpu.memory_space<vmem>>, vector<2x8x256xf32>,
      %cst_45 = arith.constant 0.000000e+00 : f32
      %84 = vector.broadcast %cst_45 : f32 to vector<2x16x256xf32>
      %c0_46 = arith.constant 0 : index
      %c0_47 = arith.constant 0 : index
      %c0_48 = arith.constant 0 : index
      %85 = vector.load %arg9[%c0_46, %c0_47, %c0_48] : memref<2x16x256xf32, #tpu.memory_space<vmem>>, vector<2x16x256xf32>
      tpu.vector_store %arg9[%c0_46, %c0_47, %c0_48], %84 {strides = array<i32>} : memref<2x16x256xf32, #tpu.memory_space<vmem>>, vector<2x16x256xf32>,
    } else {
    }
    %c0 = arith.constant 0 : index
    %c0_1 = arith.constant 0 : index
    %3 = vector.load %arg3[%c0, %c0_1] : memref<32x32xf32, #tpu.memory_space<vmem>>, vector<32x32xf32>
    %c0_2 = arith.constant 0 : index
    %c0_3 = arith.constant 0 : index
    %c0_4 = arith.constant 0 : index
    %4 = vector.load %arg2[%c0_2, %c0_3, %c0_4] : memref<1x32x256xf32, #tpu.memory_space<vmem>>, vector<1x32x256xf32>
    %5 = vector.shape_cast %4 : vector<1x32x256xf32> to vector<32x256xf32>
    %cst = arith.constant dense<0.000000e+00> : vector<32x256xf32>
    %6 = tpu.matmul %3, %5, %cst {dimension_numbers = #tpu.dot_dimension_numbers<[1], [0], [0], [1], [0, 0, 1, 1], [], []>} : vector<32x32xf32>, vector<32x256xf32>, vector<32x256xf32> -> vector<32x256xf32>
    %c0_5 = arith.constant 0 : index
    %c0_6 = arith.constant 0 : index
    %7 = vector.load %arg4[%c0_5, %c0_6] : memref<32x1xf32, #tpu.memory_space<vmem>>, vector<32x1xf32>
    %8 = vector.broadcast %7 : vector<32x1xf32> to vector<32x256xf32>
    %9 = arith.addf %6, %8 : vector<32x256xf32>
    %10 = vector.extract_strided_slice %9 {offsets = [0, 0], sizes = [8, 256], strides = [1, 1]} : vector<32x256xf32> to vector<8x256xf32>
    %11 = vector.extract_strided_slice %9 {offsets = [8, 0], sizes = [8, 256], strides = [1, 1]} : vector<32x256xf32> to vector<8x256xf32>
    %12 = vector.extract_strided_slice %9 {offsets = [16, 0], sizes = [16, 256], strides = [1, 1]} : vector<32x256xf32> to vector<16x256xf32>
    %cst_7 = arith.constant 0.000000e+00 : f32
    %13 = vector.broadcast %cst_7 : f32 to vector<16x256xf32>
    %14 = arith.maximumf %12, %13 : vector<16x256xf32>
    %c0_8 = arith.constant 0 : index
    %c0_9 = arith.constant 0 : index
    %c0_10 = arith.constant 0 : index
    %15 = vector.load %arg8[%c0_8, %c0_9, %c0_10] : memref<2x8x256xf32, #tpu.memory_space<vmem>>, vector<1x8x256xf32>
    %16 = vector.shape_cast %15 : vector<1x8x256xf32> to vector<8x256xf32>
    %c0_11 = arith.constant 0 : index
    %c0_12 = arith.constant 0 : index
    %c0_13 = arith.constant 0 : index
    %17 = vector.load %arg9[%c0_11, %c0_12, %c0_13] : memref<2x16x256xf32, #tpu.memory_space<vmem>>, vector<1x16x256xf32>
    %18 = vector.shape_cast %17 : vector<1x16x256xf32> to vector<16x256xf32>
    %c1 = arith.constant 1 : index
    %c0_14 = arith.constant 0 : index
    %c0_15 = arith.constant 0 : index
    %19 = vector.load %arg8[%c1, %c0_14, %c0_15] : memref<2x8x256xf32, #tpu.memory_space<vmem>>, vector<1x8x256xf32>
    %20 = vector.shape_cast %19 : vector<1x8x256xf32> to vector<8x256xf32>
    %c1_16 = arith.constant 1 : index
    %c0_17 = arith.constant 0 : index
    %c0_18 = arith.constant 0 : index
    %21 = vector.load %arg9[%c1_16, %c0_17, %c0_18] : memref<2x16x256xf32, #tpu.memory_space<vmem>>, vector<1x16x256xf32>
    %22 = vector.shape_cast %21 : vector<1x16x256xf32> to vector<16x256xf32>
    %23 = arith.mulf %10, %11 : vector<8x256xf32>
    %cst_19 = arith.constant dense<0.000000e+00> : vector<256xf32>
    %24 = vector.multi_reduction <add>, %23, %cst_19 [0] : vector<8x256xf32> to vector<256xf32>
    %25 = vector.shape_cast %24 : vector<256xf32> to vector<1x256xf32>
    %26 = arith.mulf %10, %16 : vector<8x256xf32>
    %cst_20 = arith.constant dense<0.000000e+00> : vector<256xf32>
    %27 = vector.multi_reduction <add>, %26, %cst_20 [0] : vector<8x256xf32> to vector<256xf32>
    %28 = vector.shape_cast %27 : vector<256xf32> to vector<1x256xf32>
    %29 = arith.mulf %10, %20 : vector<8x256xf32>
    %cst_21 = arith.constant dense<0.000000e+00> : vector<256xf32>
    %30 = vector.multi_reduction <add>, %29, %cst_21 [0] : vector<8x256xf32> to vector<256xf32>
    %31 = vector.shape_cast %30 : vector<256xf32> to vector<1x256xf32>
    %32 = arith.maximumf %28, %31 : vector<1x256xf32>
    %33 = arith.maximumf %32, %25 : vector<1x256xf32>
    %34 = arith.subf %25, %33 : vector<1x256xf32>
    %35 = math.exp %34 : vector<1x256xf32>
    %36 = arith.subf %28, %33 : vector<1x256xf32>
    %37 = math.exp %36 : vector<1x256xf32>
    %38 = arith.subf %31, %33 : vector<1x256xf32>
    %39 = math.exp %38 : vector<1x256xf32>
    %40 = arith.addf %35, %37 : vector<1x256xf32>
    %41 = arith.addf %40, %39 : vector<1x256xf32>
    %cst_22 = arith.constant 1.000000e+00 : f32
    %42 = vector.broadcast %cst_22 : f32 to vector<1x256xf32>
    %43 = arith.divf %42, %41 : vector<1x256xf32>
    %44 = arith.mulf %35, %43 : vector<1x256xf32>
    %45 = vector.broadcast %44 : vector<1x256xf32> to vector<16x256xf32>
    %46 = arith.mulf %45, %14 : vector<16x256xf32>
    %47 = arith.mulf %37, %43 : vector<1x256xf32>
    %48 = vector.broadcast %47 : vector<1x256xf32> to vector<16x256xf32>
    %49 = arith.mulf %48, %18 : vector<16x256xf32>
    %50 = arith.addf %46, %49 : vector<16x256xf32>
    %51 = arith.mulf %39, %43 : vector<1x256xf32>
    %52 = vector.broadcast %51 : vector<1x256xf32> to vector<16x256xf32>
    %53 = arith.mulf %52, %22 : vector<16x256xf32>
    %54 = arith.addf %50, %53 : vector<16x256xf32>
    %c0_23 = arith.constant 0 : index
    %c0_24 = arith.constant 0 : index
    %55 = vector.load %arg5[%c0_23, %c0_24] : memref<16x16xf32, #tpu.memory_space<vmem>>, vector<16x16xf32>
    %cst_25 = arith.constant dense<0.000000e+00> : vector<16x256xf32>
    %56 = tpu.matmul %55, %54, %cst_25 {dimension_numbers = #tpu.dot_dimension_numbers<[1], [0], [0], [1], [0, 0, 1, 1], [], []>} : vector<16x16xf32>, vector<16x256xf32>, vector<16x256xf32> -> vector<16x256xf32>
    %c0_26 = arith.constant 0 : index
    %c0_27 = arith.constant 0 : index
    %57 = vector.load %arg6[%c0_26, %c0_27] : memref<16x1xf32, #tpu.memory_space<vmem>>, vector<16x1xf32>
    %58 = vector.broadcast %57 : vector<16x1xf32> to vector<16x256xf32>
    %59 = arith.addf %56, %58 : vector<16x256xf32>
    %c0_28 = arith.constant 0 : index
    %c0_29 = arith.constant 0 : index
    %c0_30 = arith.constant 0 : index
    %60 = vector.load %arg7[%c0_28, %c0_29, %c0_30] : memref<1x32x256xf32, #tpu.memory_space<vmem>>, vector<1x16x256xf32>
    %61 = vector.shape_cast %60 : vector<1x16x256xf32> to vector<16x256xf32>
    %62 = vector.shape_cast %59 : vector<16x256xf32> to vector<1x16x256xf32>
    tpu.vector_store %arg7[%c0_28, %c0_29, %c0_30], %62 {strides = array<i32>} : memref<1x32x256xf32, #tpu.memory_space<vmem>>, vector<1x16x256xf32>,
    %c0_31 = arith.constant 0 : index
    %c16 = arith.constant 16 : index
    %c0_32 = arith.constant 0 : index
    %63 = vector.load %arg7[%c0_31, %c16, %c0_32] : memref<1x32x256xf32, #tpu.memory_space<vmem>>, vector<1x16x256xf32>
    %64 = vector.shape_cast %63 : vector<1x16x256xf32> to vector<16x256xf32>
    %65 = vector.shape_cast %14 : vector<16x256xf32> to vector<1x16x256xf32>
    tpu.vector_store %arg7[%c0_31, %c16, %c0_32], %65 {strides = array<i32>} : memref<1x32x256xf32, #tpu.memory_space<vmem>>, vector<1x16x256xf32>,
    %c2_i32 = arith.constant 2 : i32
    %c0_i32_33 = arith.constant 0 : i32
    %66 = arith.cmpi eq, %c2_i32, %c0_i32_33 : i32
    %c1_i32 = arith.constant 1 : i32
    %67 = arith.select %66, %c1_i32, %c2_i32 : i32
    %68 = arith.remsi %arg1, %67 : i32
    %c0_i32_34 = arith.constant 0 : i32
    %69 = arith.cmpi ne, %68, %c0_i32_34 : i32
    %c0_i32_35 = arith.constant 0 : i32
    %70 = arith.cmpi slt, %68, %c0_i32_35 : i32
    %c0_i32_36 = arith.constant 0 : i32
    %71 = arith.cmpi slt, %67, %c0_i32_36 : i32
    %72 = arith.xori %70, %71 : i1
    %73 = arith.andi %72, %69 : i1
    %74 = arith.addi %68, %67 : i32
    %75 = arith.select %73, %74, %68 : i32
    %c0_i32_37 = arith.constant 0 : i32
    %76 = arith.cmpi eq, %75, %c0_i32_37 : i32
    %77 = arith.extui %76 : i1 to i32
    %c0_i32_38 = arith.constant 0 : i32
    %78 = arith.cmpi ne, %77, %c0_i32_38 : i32
    scf.if %78 {
      %c0_41 = arith.constant 0 : index
      %c0_42 = arith.constant 0 : index
      %c0_43 = arith.constant 0 : index
      %82 = vector.load %arg8[%c0_41, %c0_42, %c0_43] : memref<2x8x256xf32, #tpu.memory_space<vmem>>, vector<1x8x256xf32>
      %83 = vector.shape_cast %82 : vector<1x8x256xf32> to vector<8x256xf32>
      %84 = vector.shape_cast %11 : vector<8x256xf32> to vector<1x8x256xf32>
      tpu.vector_store %arg8[%c0_41, %c0_42, %c0_43], %84 {strides = array<i32>} : memref<2x8x256xf32, #tpu.memory_space<vmem>>, vector<1x8x256xf32>,
      %c0_44 = arith.constant 0 : index
      %c0_45 = arith.constant 0 : index
      %c0_46 = arith.constant 0 : index
      %85 = vector.load %arg9[%c0_44, %c0_45, %c0_46] : memref<2x16x256xf32, #tpu.memory_space<vmem>>, vector<1x16x256xf32>
      %86 = vector.shape_cast %85 : vector<1x16x256xf32> to vector<16x256xf32>
      %87 = vector.shape_cast %14 : vector<16x256xf32> to vector<1x16x256xf32>
      tpu.vector_store %arg9[%c0_44, %c0_45, %c0_46], %87 {strides = array<i32>} : memref<2x16x256xf32, #tpu.memory_space<vmem>>, vector<1x16x256xf32>,
    } else {
    }
    %c1_i32_39 = arith.constant 1 : i32
    %79 = arith.cmpi eq, %75, %c1_i32_39 : i32
    %80 = arith.extui %79 : i1 to i32
    %c0_i32_40 = arith.constant 0 : i32
    %81 = arith.cmpi ne, %80, %c0_i32_40 : i32
    scf.if %81 {
      %c1_41 = arith.constant 1 : index
      %c0_42 = arith.constant 0 : index
      %c0_43 = arith.constant 0 : index
      %82 = vector.load %arg8[%c1_41, %c0_42, %c0_43] : memref<2x8x256xf32, #tpu.memory_space<vmem>>, vector<1x8x256xf32>
      %83 = vector.shape_cast %82 : vector<1x8x256xf32> to vector<8x256xf32>
      %84 = vector.shape_cast %11 : vector<8x256xf32> to vector<1x8x256xf32>
      tpu.vector_store %arg8[%c1_41, %c0_42, %c0_43], %84 {strides = array<i32>} : memref<2x8x256xf32, #tpu.memory_space<vmem>>, vector<1x8x256xf32>,
      %c1_44 = arith.constant 1 : index
      %c0_45 = arith.constant 0 : index
      %c0_46 = arith.constant 0 : index
      %85 = vector.load %arg9[%c1_44, %c0_45, %c0_46] : memref<2x16x256xf32, #tpu.memory_space<vmem>>, vector<1x16x256xf32>
      %86 = vector.shape_cast %85 : vector<1x16x256xf32> to vector<16x256xf32>
      %87 = vector.shape_cast %14 : vector<16x256xf32> to vector<1x16x256xf32>
      tpu.vector_store %arg9[%c1_44, %c0_45, %c0_46], %87 {strides = array<i32>} : memref<2x16x256xf32, #tpu.memory_space<vmem>>, vector<1x16x256xf32>,
    } else {
    }
    return
  }
  func.func @transform_0(%arg0: i32, %arg1: i32) -> (i32, i32, i32) {
    %c0_i32 = arith.constant 0 : i32
    %c0_i32_0 = arith.constant 0 : i32
    return %arg1, %c0_i32, %arg0 : i32, i32, i32
  }
  func.func @transform_1(%arg0: i32, %arg1: i32) -> (i32, i32) {
    %c0_i32 = arith.constant 0 : i32
    %c0_i32_0 = arith.constant 0 : i32
    %c0_i32_1 = arith.constant 0 : i32
    return %c0_i32, %c0_i32_0 : i32, i32
  }
  func.func @transform_2(%arg0: i32, %arg1: i32) -> (i32, i32) {
    %c0_i32 = arith.constant 0 : i32
    %c0_i32_0 = arith.constant 0 : i32
    %c0_i32_1 = arith.constant 0 : i32
    return %c0_i32, %c0_i32_0 : i32, i32
  }
  func.func @transform_3(%arg0: i32, %arg1: i32) -> (i32, i32) {
    %c0_i32 = arith.constant 0 : i32
    %c0_i32_0 = arith.constant 0 : i32
    %c0_i32_1 = arith.constant 0 : i32
    return %c0_i32, %c0_i32_0 : i32, i32
  }
  func.func @transform_4(%arg0: i32, %arg1: i32) -> (i32, i32) {
    %c0_i32 = arith.constant 0 : i32
    %c0_i32_0 = arith.constant 0 : i32
    %c0_i32_1 = arith.constant 0 : i32
    return %c0_i32, %c0_i32_0 : i32, i32
  }
  func.func @transform_5(%arg0: i32, %arg1: i32) -> (i32, i32, i32) {
    %c0_i32 = arith.constant 0 : i32
    %c0_i32_0 = arith.constant 0 : i32
    return %arg1, %c0_i32, %arg0 : i32, i32, i32
  }
}

</mosaic_0001>

<llo_original>
// kernel: tpu_custom_call.1
$region0: #{tpu_custom_call.1}
  #allocation0 [shape = 'u32[]', space=smem, size = 0x4, offset = 0x4, fixed_abs, tag = 'smem constant byte address 0x4 - core index']
  #allocation1 [shape = 'u32[144,128]{1,0:T(1,128)}', space=vmem, size = 0x12000, scoped, tag = 'internal scratch']
  #allocation2 [shape = 'f32[2,8,256]{2,1,0:T(8,128)}', space=vmem, size = 0x4000, scoped, tag = 'scratch operand']
  #allocation3 [shape = 'f32[2,16,256]{2,1,0:T(8,128)}', space=vmem, size = 0x8000, scoped, tag = 'scratch operand']
  %s0 = inlined_call_operand.hbm [shape: f32[8,32,256], index: 0, kind: input, shape index: {}]
  %s1 = inlined_call_operand.vmem [shape: f32[32,32], index: 1, kind: input, shape index: {}]
  %s2 = inlined_call_operand.vmem [shape: f32[32,1], index: 2, kind: input, shape index: {}]
  %s3 = inlined_call_operand.vmem [shape: f32[16,16], index: 3, kind: input, shape index: {}]
  %s4 = inlined_call_operand.vmem [shape: f32[16,1], index: 4, kind: input, shape index: {}]
  %s5 = inlined_call_operand.hbm [shape: f32[8,32,256], index: 5, kind: output, shape index: {}]
  %s6 = sld [smem:[#allocation0]]
  $region69: #{tpu_custom_call.1} parent=0
    _
  %s8 = ssub.s32 1, %s6
  %s9 = scalar_select 0, %s8, %s6
  $region1: #{tpu_custom_call.1} parent=0
    #allocation4 [shape = 'u8[65536]{0}', space=vmem, size = 0x10000, scoped, tag = 'input window, operand 0']
    #allocation5 [shape = 's32[2]{0}', space=sflag, size = 0x8, scoped, tag = 'scoped memory for tpu_custom_call.1']
    #allocation6 [shape = 's32[2]{0}', space=sflag, size = 0x8, scoped, tag = 'scoped memory for tpu_custom_call.1']
    #allocation7 [shape = 'u8[65536]{0}', space=vmem, size = 0x10000, scoped, tag = 'output window, operand 0']
    %10 = vsyncpa [#allocation5], 0
    %s11 = scalar_lea.sflag [#allocation5], 1
    %12 = vsyncpa %s11, 0
    %13 = vsyncpa [#allocation6], 0
    %s14 = scalar_lea.sflag [#allocation6], 1
    %15 = vsyncpa %s14, 0
    loop: start=0, step=1, limit=10
    $region2: #{tpu_custom_call.1} parent=1 // loop_pre_header
      _
    $region3: #{tpu_custom_call.1} parent=1 // loop_header
      %s17 = sphi 0, %s21
      %p18 = scmp.ge.s32.totalorder %s17, 10
      %s24 = sphi 0, %s36
      %s25 = sphi 0, %s32
      %s26 = sphi 0, %s24
      %s27 = sphi 0, %s25
      %s28 = sphi 0, %s26
      %s29 = sphi 0, %s27
      %s41 = sphi 0, %s43
      %s44 = sphi 0, %s41
      %s45 = sphi 0, %s44
      %s61 = sphi 0, %s45
      %s65 = sphi 0, %s65
      %s67 = sphi 0, %s65
      %s68 = sphi 0, %s67
      %s82 = sphi 0, %s68
      %s86 = sphi 0, %s86
      %s88 = sphi 0, %s86
      %s89 = sphi 0, %s88
      %s103 = sphi 0, %s89
      %s107 = sphi 0, %s107
      %s109 = sphi 0, %s107
      %s110 = sphi 0, %s109
      %s124 = sphi 0, %s110
      %s128 = sphi 0, %s128
      %s130 = sphi 0, %s128
      %s131 = sphi 0, %s130
      %s145 = sphi 0, %s131
      %s153 = sphi 0, %s155
      %s156 = sphi 0, %s153
      %s157 = sphi 0, %s156
      %s173 = sphi 0, %s157
    $region4: #{tpu_custom_call.1} parent=1 // loop_header_branch
      %20 = sbr.rel (%p18) target = $region8
    $region5: #{tpu_custom_call.1} parent=1 // loop_body
      %s22 = ssub.s32 %s17, 1
      %s23 = ssub.s32 %s17, 2
      %s30 = sadd.s32 1, %s25
      %p31 = scmp.ge.s32.totalorder %s30, 8
      %s32 = scalar_select %p31, 0, %s30
      %s33 = sadd.s32 1, %s24
      %s34 = scalar_select %p31, %s33, %s24
      %p35 = scmp.ge.s32.totalorder %s34, 1
      %s36 = scalar_select %p35, 0, %s34
      %s37 = ssub.s32 %s25, %s32
      %s38 = ssub.s32 %s24, %s36
      %s39 = sor.u32 %s37, %s38
      %p40 = scmp.eq.s32.totalorder %s39, 0
      %s42 = sadd.s32 %s41, 1
      %s43 = scalar_select %p40, %s41, %s42
      %p46 = pneg %p40
      %p47 = scmp.eq.s32.totalorder %s17, 7
      %p48 = por %p46, %p47
      %p49 = scmp.ne.s32.totalorder %s41, %s44
      %p50 = scmp.eq.s32.totalorder %s17, 0
      %p51 = por %p49, %p50
      %p52 = scmp.ne.s32.totalorder %s41, %s44
      %p53 = scmp.eq.s32.totalorder %s22, 7
      %p54 = por %p52, %p53
      %p55 = scmp.ne.s32.totalorder %s44, %s45
      %p56 = scmp.eq.s32.totalorder %s22, 0
      %p57 = por %p55, %p56
      %p58 = scmp.ne.s32.totalorder %s44, %s45
      %p59 = scmp.eq.s32.totalorder %s23, 7
      %p60 = por %p58, %p59
      %p62 = scmp.ne.s32.totalorder %s45, %s61
      %p63 = scmp.eq.s32.totalorder %s23, 0
      %p64 = por %p62, %p63
      %s66 = sadd.s32 %s65, 1
      %p69 = scmp.eq.s32.totalorder %s17, 7
      %p70 = scmp.ne.s32.totalorder %s65, %s67
      %p71 = scmp.eq.s32.totalorder %s17, 0
      %p72 = por %p70, %p71
      %p73 = scmp.ne.s32.totalorder %s65, %s67
      %p74 = scmp.eq.s32.totalorder %s22, 7
      %p75 = por %p73, %p74
      %p76 = scmp.ne.s32.totalorder %s67, %s68
      %p77 = scmp.eq.s32.totalorder %s22, 0
      %p78 = por %p76, %p77
      %p79 = scmp.ne.s32.totalorder %s67, %s68
      %p80 = scmp.eq.s32.totalorder %s23, 7
      %p81 = por %p79, %p80
      %p83 = scmp.ne.s32.totalorder %s68, %s82
      %p84 = scmp.eq.s32.totalorder %s23, 0
      %p85 = por %p83, %p84
      %s87 = sadd.s32 %s86, 1
      %p90 = scmp.eq.s32.totalorder %s17, 7
      %p91 = scmp.ne.s32.totalorder %s86, %s88
      %p92 = scmp.eq.s32.totalorder %s17, 0
      %p93 = por %p91, %p92
      %p94 = scmp.ne.s32.totalorder %s86, %s88
      %p95 = scmp.eq.s32.totalorder %s22, 7
      %p96 = por %p94, %p95
      %p97 = scmp.ne.s32.totalorder %s88, %s89
      %p98 = scmp.eq.s32.totalorder %s22, 0
      %p99 = por %p97, %p98
      %p100 = scmp.ne.s32.totalorder %s88, %s89
      %p101 = scmp.eq.s32.totalorder %s23, 7
      %p102 = por %p100, %p101
      %p104 = scmp.ne.s32.totalorder %s89, %s103
      %p105 = scmp.eq.s32.totalorder %s23, 0
      %p106 = por %p104, %p105
      %s108 = sadd.s32 %s107, 1
      %p111 = scmp.eq.s32.totalorder %s17, 7
      %p112 = scmp.ne.s32.totalorder %s107, %s109
      %p113 = scmp.eq.s32.totalorder %s17, 0
      %p114 = por %p112, %p113
      %p115 = scmp.ne.s32.totalorder %s107, %s109
      %p116 = scmp.eq.s32.totalorder %s22, 7
      %p117 = por %p115, %p116
      %p118 = scmp.ne.s32.totalorder %s109, %s110
      %p119 = scmp.eq.s32.totalorder %s22, 0
      %p120 = por %p118, %p119
      %p121 = scmp.ne.s32.totalorder %s109, %s110
      %p122 = scmp.eq.s32.totalorder %s23, 7
      %p123 = por %p121, %p122
      %p125 = scmp.ne.s32.totalorder %s110, %s124
      %p126 = scmp.eq.s32.totalorder %s23, 0
      %p127 = por %p125, %p126
      %s129 = sadd.s32 %s128, 1
      %p132 = scmp.eq.s32.totalorder %s17, 7
      %p133 = scmp.ne.s32.totalorder %s128, %s130
      %p134 = scmp.eq.s32.totalorder %s17, 0
      %p135 = por %p133, %p134
      %p136 = scmp.ne.s32.totalorder %s128, %s130
      %p137 = scmp.eq.s32.totalorder %s22, 7
      %p138 = por %p136, %p137
      %p139 = scmp.ne.s32.totalorder %s130, %s131
      %p140 = scmp.eq.s32.totalorder %s22, 0
      %p141 = por %p139, %p140
      %p142 = scmp.ne.s32.totalorder %s130, %s131
      %p143 = scmp.eq.s32.totalorder %s23, 7
      %p144 = por %p142, %p143
      %p146 = scmp.ne.s32.totalorder %s131, %s145
      %p147 = scmp.eq.s32.totalorder %s23, 0
      %p148 = por %p146, %p147
      %s149 = ssub.s32 %s25, %s32
      %s150 = ssub.s32 %s24, %s36
      %s151 = sor.u32 %s149, %s150
      %p152 = scmp.eq.s32.totalorder %s151, 0
      %s154 = sadd.s32 %s153, 1
      %s155 = scalar_select %p152, %s153, %s154
      %p158 = pneg %p152
      %p159 = scmp.eq.s32.totalorder %s17, 7
      %p160 = por %p158, %p159
      %p161 = scmp.ne.s32.totalorder %s153, %s156
      %p162 = scmp.eq.s32.totalorder %s17, 0
      %p163 = por %p161, %p162
      %p164 = scmp.ne.s32.totalorder %s153, %s156
      %p165 = scmp.eq.s32.totalorder %s22, 7
      %p166 = por %p164, %p165
      %p167 = scmp.ne.s32.totalorder %s156, %s157
      %p168 = scmp.eq.s32.totalorder %s22, 0
      %p169 = por %p167, %p168
      %p170 = scmp.ne.s32.totalorder %s156, %s157
      %p171 = scmp.eq.s32.totalorder %s23, 7
      %p172 = por %p170, %p171
      %p174 = scmp.ne.s32.totalorder %s157, %s173
      %p175 = scmp.eq.s32.totalorder %s23, 0
      %p176 = por %p174, %p175
      %p177 = scmp.le.s32.totalorder 1, %s17
      %p178 = scmp.lt.s32.totalorder %s17, 9
      %p179 = pnand %p177, %p178
      %p180 = pneg %p179
      // Predicated region
      $region9: #{tpu_custom_call.1} parent=5 // pred_check
        _
      $region10: #{tpu_custom_call.1} parent=5 // pred_check_branch
        %182 = sbr.rel (%p179) target = $region12
      $region11: #{tpu_custom_call.1} parent=5 // pred_region
        %s183 = ssub.s32 %s17, 1
        // Predicated region
        $region13: #{tpu_custom_call.1} parent=11 // pred_check
          %p184 = pneg %p78
        $region14: #{tpu_custom_call.1} parent=11 // pred_check_branch
          %186 = sbr.rel (%p184) target = $region16
        $region15: #{tpu_custom_call.1} parent=11 // pred_region
          _
        $region16: #{tpu_custom_call.1} parent=11 // pred_fallthru
          _
        // Predicated region
        $region17: #{tpu_custom_call.1} parent=11 // pred_check
          %p187 = pneg %p99
        $region18: #{tpu_custom_call.1} parent=11 // pred_check_branch
          %189 = sbr.rel (%p187) target = $region20
        $region19: #{tpu_custom_call.1} parent=11 // pred_region
          _
        $region20: #{tpu_custom_call.1} parent=11 // pred_fallthru
          _
        // Predicated region
        $region21: #{tpu_custom_call.1} parent=11 // pred_check
          %p190 = pneg %p120
        $region22: #{tpu_custom_call.1} parent=11 // pred_check_branch
          %192 = sbr.rel (%p190) target = $region24
        $region23: #{tpu_custom_call.1} parent=11 // pred_region
          _
        $region24: #{tpu_custom_call.1} parent=11 // pred_fallthru
          _
        // Predicated region
        $region25: #{tpu_custom_call.1} parent=11 // pred_check
          %p193 = pneg %p141
        $region26: #{tpu_custom_call.1} parent=11 // pred_check_branch
          %195 = sbr.rel (%p193) target = $region28
        $region27: #{tpu_custom_call.1} parent=11 // pred_region
          _
        $region28: #{tpu_custom_call.1} parent=11 // pred_fallthru
          _
      $region12: #{tpu_custom_call.1} parent=5 // pred_fallthru
        _
      %p196 = scmp.lt.s32.totalorder %s17, 8
      // Predicated region
      $region29: #{tpu_custom_call.1} parent=5 // pred_check
        %p197 = pneg %p196
      $region30: #{tpu_custom_call.1} parent=5 // pred_check_branch
        %199 = sbr.rel (%p197) target = $region32
      $region31: #{tpu_custom_call.1} parent=5 // pred_region
        // Predicated region
        $region33: #{tpu_custom_call.1} parent=31 // pred_check
          %p200 = pneg %p51
        $region34: #{tpu_custom_call.1} parent=31 // pred_check_branch
          %202 = sbr.rel (%p200) target = $region36
        $region35: #{tpu_custom_call.1} parent=31 // pred_region
          %s203 = sand.u32 %s41, 1
          %s204 = scalar_lea.sflag [#allocation5], %s203
          %s205 = sand.u32 %s41, 1
          %s206 = smul.addr %s205, 64
          %s207 = scalar_lea.vmem [#allocation4], %s206
          %s208 = smul.u32 2, %s24
          %s210 = ssub.s32 1024, 1024
          %211 = vsyncadd %s204, %s210
          %s212 = smul.addr %s25, 8
          %s213 = sadd.s32 %s208, %s212
          %s214 = smul.addr %s213, 128
          %s215 = scalar_lea.hbm %s0, %s214
          %s216 = sshll.u32 %s207, 4
          %s217 = int_to_ptr.vmem [resolvable:$true] %s216
          %222 = dma.hbm_to_vmem [thread:$0]  %s215, 1024, %s217, %s204, 256, 256, 16
        $region36: #{tpu_custom_call.1} parent=31 // pred_fallthru
          _
      $region32: #{tpu_custom_call.1} parent=5 // pred_fallthru
        _
      %p223 = scmp.le.s32.totalorder 1, %s17
      %p224 = scmp.lt.s32.totalorder %s17, 9
      %p225 = pnand %p223, %p224
      %p226 = pneg %p225
      // Predicated region
      $region37: #{tpu_custom_call.1} parent=5 // pred_check
        _
      $region38: #{tpu_custom_call.1} parent=5 // pred_check_branch
        %228 = sbr.rel (%p225) target = $region40
      $region39: #{tpu_custom_call.1} parent=5 // pred_region
        %s229 = ssub.s32 %s17, 1
        %s230 = sand.u32 %s44, 1
        %s231 = scalar_lea.sflag [#allocation5], %s230
        %s232 = sand.u32 %s44, 1
        %s233 = smul.addr %s232, 64
        %s234 = scalar_lea.vmem [#allocation4], %s233
        // Predicated region
        $region41: #{tpu_custom_call.1} parent=39 // pred_check
          %p235 = pneg %p57
        $region42: #{tpu_custom_call.1} parent=39 // pred_check_branch
          %237 = sbr.rel (%p235) target = $region44
        $region43: #{tpu_custom_call.1} parent=39 // pred_region
          %238 = dma.done %s231, 1024
        $region44: #{tpu_custom_call.1} parent=39 // pred_fallthru
          _
        %s239 = sand.u32 %s44, 1
        %s240 = scalar_lea.sflag [#allocation5], %s239
        %s241 = sand.u32 %s44, 1
        %s242 = smul.addr %s241, 64
        %s243 = scalar_lea.vmem [#allocation4], %s242
        %p244 = pneg %p57
        %p245 = pneg %p54
        %p246 = pneg %p78
        %p247 = pneg %p75
        %p248 = pneg %p99
        %p249 = pneg %p96
        %p250 = pneg %p120
        %p251 = pneg %p117
        %p252 = pneg %p141
        %p253 = pneg %p138
        %p254 = pneg %p169
        %p255 = pneg %p166
        %s256 = sand.u32 %s156, 1
        %s257 = scalar_lea.sflag [#allocation6], %s256
        %s258 = sand.u32 %s156, 1
        %s259 = smul.addr %s258, 64
        %s260 = scalar_lea.vmem [#allocation7], %s259
        %s261 = smul.u32 2, %s26
        %s262 = smul.u32 2, %s26
        %p263 = scmp.eq.s32.totalorder %s27, 0
        // Predicated region
        $region45: #{tpu_custom_call.1} parent=39 // pred_check
          %p264 = pneg %p263
        $region46: #{tpu_custom_call.1} parent=39 // pred_check_branch
          %266 = sbr.rel (%p264) target = $region48
        $region47: #{tpu_custom_call.1} parent=39 // pred_region
          %267 = vst [vmem:[#allocation2] sm:$0xff] 0.0
          %268 = vst [vmem:[#allocation2 + $0x8] sm:$0xff] 0.0
          %269 = vst [vmem:[#allocation2 + $0x10] sm:$0xff] 0.0
          %270 = vst [vmem:[#allocation2 + $0x18] sm:$0xff] 0.0
          %271 = vst [vmem:[#allocation3] sm:$0xff] 0.0
          %272 = vst [vmem:[#allocation3 + $0x8] sm:$0xff] 0.0
          %273 = vst [vmem:[#allocation3 + $0x10] sm:$0xff] 0.0
          %274 = vst [vmem:[#allocation3 + $0x18] sm:$0xff] 0.0
          %275 = vst [vmem:[#allocation3 + $0x20] sm:$0xff] 0.0
          %276 = vst [vmem:[#allocation3 + $0x28] sm:$0xff] 0.0
          %277 = vst [vmem:[#allocation3 + $0x30] sm:$0xff] 0.0
          %278 = vst [vmem:[#allocation3 + $0x38] sm:$0xff] 0.0
        $region48: #{tpu_custom_call.1} parent=39 // pred_fallthru
          _
        %v279 = vld [vmem:[%s1] sm:$0xff]
        %v280 = vld [vmem:[%s1 + $0x8] sm:$0xff]
        %v281 = vld [vmem:[%s1 + $0x10] sm:$0xff]
        %v282 = vld [vmem:[%s1 + $0x18] sm:$0xff]
        %v283 = vld [vmem:[%s234] sm:$0xff]
        %v284 = vld [vmem:[%s234 + $0x8] sm:$0xff]
        %v285 = vld [vmem:[%s234 + $0x10] sm:$0xff]
        %v286 = vld [vmem:[%s234 + $0x18] sm:$0xff]
        %v287 = vld [vmem:[%s234 + $0x20] sm:$0xff]
        %v288 = vld [vmem:[%s234 + $0x28] sm:$0xff]
        %v289 = vld [vmem:[%s234 + $0x30] sm:$0xff]
        %v290 = vld [vmem:[%s234 + $0x38] sm:$0xff]
        %v291 = vld [vmem:[%s2] sm:$0xff]
        %v292 = vld [vmem:[%s2 + $0x8] sm:$0xff]
        %v293 = vld [vmem:[%s2 + $0x10] sm:$0xff]
        %v294 = vld [vmem:[%s2 + $0x18] sm:$0xff]
        %296 = vset.pattern.permute.xlu0 0
        %297 = vperm.xlu0 %296, %v291
        %v298 = vpop.permute.xlu0 %297
        %301 = vset.pattern.permute.xlu0 0
        %302 = vperm.xlu0 %301, %v292
        %v303 = vpop.permute.xlu0 %302
        %306 = vset.pattern.permute.xlu0 0
        %307 = vperm.xlu0 %306, %v293
        %v308 = vpop.permute.xlu0 %307
        %311 = vset.pattern.permute.xlu0 0
        %312 = vperm.xlu0 %311, %v294
        %v313 = vpop.permute.xlu0 %312
        %vm315 = vcmask 261120
        %v317 = vsel %vm315, %v279, 0
        %v320 = vsel %vm315, %v280, 0
        %v323 = vsel %vm315, %v281, 0
        %v326 = vsel %vm315, %v282, 0
        %328 = vmatprep.subr.mxu0 %v284
        %329 = vmatpush1.msra.mxu0 %v283
        %330 = vmatprep.subr.mxu0 %v286
        %331 = vmatpush1.msra.mxu0 %v285
        %332 = vmatprep.subr.mxu0 %v288
        %333 = vmatpush1.msra.mxu0 %v287
        %334 = vmatprep.subr.mxu0 %v290
        %335 = vmatpush1.msra.mxu0 %v289
        %336 = vmatprep.subr.mxu0 0.0
        %337 = vmatpush1.msra.mxu0 0.0
        %338 = vmatprep.subr.mxu0 0.0
        %339 = vmatpush1.msra.mxu0 0.0
        %340 = vmatprep.subr.mxu0 0.0
        %341 = vmatpush1.msra.mxu0 0.0
        %342 = vmatprep.subr.mxu0 0.0
        %343 = vmatpush1.msra.mxu0 0.0
        %344 = vmatprep.subr.mxu0 0.0
        %345 = vmatpush1.msra.mxu0 0.0
        %346 = vmatprep.subr.mxu0 0.0
        %347 = vmatpush1.msra.mxu0 0.0
        %348 = vmatprep.subr.mxu0 0.0
        %349 = vmatpush1.msra.mxu0 0.0
        %350 = vmatprep.subr.mxu0 0.0
        %351 = vmatpush1.msra.mxu0 0.0
        %352 = vmatprep.subr.mxu0 0.0
        %353 = vmatpush1.msra.mxu0 0.0
        %354 = vmatprep.subr.mxu0 0.0
        %355 = vmatpush1.msra.mxu0 0.0
        %356 = vmatprep.subr.mxu0 0.0
        %357 = vmatpush1.msra.mxu0 0.0
        %358 = vmatprep.subr.mxu0 0.0
        %359 = vmatpush1.msra.mxu0 0.0
        %360 = vmatprep.subr.mxu0 0.0
        %361 = vmatpush1.msra.mxu0 0.0
        %362 = vmatprep.subr.mxu0 0.0
        %363 = vmatpush1.msra.mxu0 0.0
        %364 = vmatprep.subr.mxu0 0.0
        %365 = vmatpush1.msra.mxu0 0.0
        %366 = vmatprep.subr.mxu0 0.0
        %367 = vmatpush1.msra.mxu0 0.0
        %368 = vmatprep.subr.mxu0 0.0
        %369 = vmatpush1.msra.mxu0 0.0
        %370 = vmatprep.subr.mxu0 0.0
        %371 = vmatpush1.msra.mxu0 0.0
        %372 = vmatprep.subr.mxu0 0.0
        %373 = vmatpush1.msra.mxu0 0.0
        %374 = vmatprep.subr.mxu0 0.0
        %375 = vmatpush1.msra.mxu0 0.0
        %376 = vmatprep.subr.mxu0 0.0
        %377 = vmatpush1.msra.mxu0 0.0
        %378 = vmatprep.subr.mxu0 0.0
        %379 = vmatpush1.msra.mxu0 0.0
        %380 = vmatprep.subr.mxu0 0.0
        %381 = vmatpush1.msra.mxu0 0.0
        %382 = vmatprep.subr.mxu0 0.0
        %383 = vmatpush1.msra.mxu0 0.0
        %384 = vmatprep.subr.mxu0 0.0
        %385 = vmatpush1.msra.mxu0 0.0
        %386 = vmatprep.subr.mxu0 0.0
        %387 = vmatpush1.msra.mxu0 0.0
        %388 = vmatprep.subr.mxu0 0.0
        %389 = vmatpush1.msra.mxu0 0.0
        %390 = vmatprep.subr.mxu0 0.0
        %391 = vmatpush1.msra.mxu0 0.0
        %392 = vmatprep.mubr.f32.mxu0 0.0
        %393 = vmatmul.mubr.f32.gmra.mrb[0].mxu0 %v317
        %v394 = vpop.f32.mrb[0].mxu0
        %v395 = vadd.f32 %v298, %v394
        %v396 = vpop.f32.mrb[0].mxu0
        %v397 = vadd.f32 %v298, %v396
        %398 = vmatprep.mubr.f32.mxu0 0.0
        %399 = vmatmul.mubr.f32.gmra.mrb[0].mxu0 %v320
        %v400 = vpop.f32.mrb[0].mxu0
        %v401 = vadd.f32 %v303, %v400
        %v402 = vpop.f32.mrb[0].mxu0
        %v403 = vadd.f32 %v303, %v402
        %404 = vmatprep.mubr.f32.mxu0 0.0
        %405 = vmatmul.mubr.f32.gmra.mrb[0].mxu0 %v323
        %v406 = vpop.f32.mrb[0].mxu0
        %v407 = vadd.f32 %v308, %v406
        %v408 = vpop.f32.mrb[0].mxu0
        %v409 = vadd.f32 %v308, %v408
        %410 = vmatprep.mubr.f32.mxu0 0.0
        %411 = vmatmul.mubr.f32.gmra.mrb[0].mxu0 %v326
        %v412 = vpop.f32.mrb[0].mxu0
        %v413 = vadd.f32 %v313, %v412
        %v414 = vpop.f32.mrb[0].mxu0
        %v415 = vadd.f32 %v313, %v414
        %416 = vdwg.mxu0
        %v417 = vmax.f32 %v407, 0.0
        %v418 = vmax.f32 %v409, 0.0
        %v419 = vmax.f32 %v413, 0.0
        %v420 = vmax.f32 %v415, 0.0
        %v421 = vld [vmem:[#allocation2] sm:$0xff]
        %v422 = vld [vmem:[#allocation2 + $0x8] sm:$0xff]
        %v423 = vld [vmem:[#allocation3] sm:$0xff]
        %v424 = vld [vmem:[#allocation3 + $0x8] sm:$0xff]
        %v425 = vld [vmem:[#allocation3 + $0x10] sm:$0xff]
        %v426 = vld [vmem:[#allocation3 + $0x18] sm:$0xff]
        %s427 = scalar_lea.vmem [#allocation2], 16
        %v428 = vld [vmem:[%s427] sm:$0xff]
        %v429 = vld [vmem:[%s427 + $0x8] sm:$0xff]
        %s430 = scalar_lea.vmem [#allocation3], 32
        %v431 = vld [vmem:[%s430] sm:$0xff]
        %v432 = vld [vmem:[%s430 + $0x8] sm:$0xff]
        %v433 = vld [vmem:[%s430 + $0x10] sm:$0xff]
        %v434 = vld [vmem:[%s430 + $0x18] sm:$0xff]
        %v435 = vmul.f32 %v395, %v401
        %v436 = vmul.f32 %v397, %v403
        %v437 = vrot.slane %v435, 4
        %v438 = vadd.f32 %v435, %v437
        %v439 = vrot.slane %v438, 2
        %v440 = vadd.f32 %v438, %v439
        %v441 = vrot.slane %v440, 1
        %v442 = vadd.f32 %v440, %v441
        %v443 = vrot.slane %v436, 4
        %v444 = vadd.f32 %v436, %v443
        %v445 = vrot.slane %v444, 2
        %v446 = vadd.f32 %v444, %v445
        %v447 = vrot.slane %v446, 1
        %v448 = vadd.f32 %v446, %v447
        %v449 = vmul.f32 %v395, %v421
        %v450 = vmul.f32 %v397, %v422
        %v451 = vrot.slane %v449, 4
        %v452 = vadd.f32 %v449, %v451
        %v453 = vrot.slane %v452, 2
        %v454 = vadd.f32 %v452, %v453
        %v455 = vrot.slane %v454, 1
        %v456 = vadd.f32 %v454, %v455
        %v457 = vrot.slane %v450, 4
        %v458 = vadd.f32 %v450, %v457
        %v459 = vrot.slane %v458, 2
        %v460 = vadd.f32 %v458, %v459
        %v461 = vrot.slane %v460, 1
        %v462 = vadd.f32 %v460, %v461
        %v463 = vmul.f32 %v395, %v428
        %v464 = vmul.f32 %v397, %v429
        %v465 = vrot.slane %v463, 4
        %v466 = vadd.f32 %v463, %v465
        %v467 = vrot.slane %v466, 2
        %v468 = vadd.f32 %v466, %v467
        %v469 = vrot.slane %v468, 1
        %v470 = vadd.f32 %v468, %v469
        %v471 = vrot.slane %v464, 4
        %v472 = vadd.f32 %v464, %v471
        %v473 = vrot.slane %v472, 2
        %v474 = vadd.f32 %v472, %v473
        %v475 = vrot.slane %v474, 1
        %v476 = vadd.f32 %v474, %v475
        %v477 = vmax.f32 %v456, %v470
        %v478 = vmax.f32 %v462, %v476
        %v479 = vmax.f32 %v477, %v442
        %v480 = vmax.f32 %v478, %v448
        %v481 = vsub.f32 %v442, %v479
        %v482 = vsub.f32 %v448, %v480
        %v483 = vmul.f32 %v481, 1.442695
        %v484 = vpow.pop %v483
        %v485 = vmul.f32 %v482, 1.442695
        %v486 = vpow.pop %v485
        %v487 = vsub.f32 %v456, %v479
        %v488 = vsub.f32 %v462, %v480
        %v489 = vmul.f32 %v487, 1.442695
        %v490 = vpow.pop %v489
        %v491 = vmul.f32 %v488, 1.442695
        %v492 = vpow.pop %v491
        %v493 = vsub.f32 %v470, %v479
        %v494 = vsub.f32 %v476, %v480
        %v495 = vmul.f32 %v493, 1.442695
        %v496 = vpow.pop %v495
        %v497 = vmul.f32 %v494, 1.442695
        %v498 = vpow.pop %v497
        %v499 = vadd.f32 %v484, %v490
        %v500 = vadd.f32 %v486, %v492
        %v501 = vadd.f32 %v499, %v496
        %v502 = vadd.f32 %v500, %v498
        %v503 = vrcp.pop %v501
        %v504 = vmul.f32 1.0, %v503
        %v505 = vrcp.pop %v502
        %v506 = vmul.f32 1.0, %v505
        %v507 = vmul.f32 %v484, %v504
        %v508 = vmul.f32 %v486, %v506
        %v509 = vmul.f32 %v507, %v417
        %v510 = vmul.f32 %v508, %v418
        %v511 = vmul.f32 %v507, %v419
        %v512 = vmul.f32 %v508, %v420
        %v513 = vmul.f32 %v490, %v504
        %v514 = vmul.f32 %v492, %v506
        %v515 = vmul.f32 %v513, %v423
        %v516 = vmul.f32 %v514, %v424
        %v517 = vmul.f32 %v513, %v425
        %v518 = vmul.f32 %v514, %v426
        %v519 = vadd.f32 %v509, %v515
        %v520 = vadd.f32 %v510, %v516
        %v521 = vadd.f32 %v511, %v517
        %v522 = vadd.f32 %v512, %v518
        %v523 = vmul.f32 %v496, %v504
        %v524 = vmul.f32 %v498, %v506
        %v525 = vmul.f32 %v523, %v431
        %v526 = vmul.f32 %v524, %v432
        %v527 = vmul.f32 %v523, %v433
        %v528 = vmul.f32 %v524, %v434
        %v529 = vadd.f32 %v519, %v525
        %v530 = vadd.f32 %v520, %v526
        %v531 = vadd.f32 %v521, %v527
        %v532 = vadd.f32 %v522, %v528
        %v533 = vld [vmem:[%s3] sm:$0xff]
        %v534 = vld [vmem:[%s3 + $0x8] sm:$0xff]
        %v535 = vld [vmem:[%s4] sm:$0xff]
        %v536 = vld [vmem:[%s4 + $0x8] sm:$0xff]
        %538 = vset.pattern.permute.xlu0 0
        %539 = vperm.xlu0 %538, %v535
        %v540 = vpop.permute.xlu0 %539
        %543 = vset.pattern.permute.xlu0 0
        %544 = vperm.xlu0 %543, %v536
        %v545 = vpop.permute.xlu0 %544
        %vm547 = vcmask 130048
        %v549 = vsel %vm547, %v533, 0
        %v552 = vsel %vm547, %v534, 0
        %554 = vmatprep.subr.mxu0 %v530
        %555 = vmatpush1.msra.mxu0 %v529
        %556 = vmatprep.subr.mxu0 %v532
        %557 = vmatpush1.msra.mxu0 %v531
        %558 = vmatprep.subr.mxu0 0.0
        %559 = vmatpush1.msra.mxu0 0.0
        %560 = vmatprep.subr.mxu0 0.0
        %561 = vmatpush1.msra.mxu0 0.0
        %562 = vmatprep.subr.mxu0 0.0
        %563 = vmatpush1.msra.mxu0 0.0
        %564 = vmatprep.subr.mxu0 0.0
        %565 = vmatpush1.msra.mxu0 0.0
        %566 = vmatprep.subr.mxu0 0.0
        %567 = vmatpush1.msra.mxu0 0.0
        %568 = vmatprep.subr.mxu0 0.0
        %569 = vmatpush1.msra.mxu0 0.0
        %570 = vmatprep.subr.mxu0 0.0
        %571 = vmatpush1.msra.mxu0 0.0
        %572 = vmatprep.subr.mxu0 0.0
        %573 = vmatpush1.msra.mxu0 0.0
        %574 = vmatprep.subr.mxu0 0.0
        %575 = vmatpush1.msra.mxu0 0.0
        %576 = vmatprep.subr.mxu0 0.0
        %577 = vmatpush1.msra.mxu0 0.0
        %578 = vmatprep.subr.mxu0 0.0
        %579 = vmatpush1.msra.mxu0 0.0
        %580 = vmatprep.subr.mxu0 0.0
        %581 = vmatpush1.msra.mxu0 0.0
        %582 = vmatprep.subr.mxu0 0.0
        %583 = vmatpush1.msra.mxu0 0.0
        %584 = vmatprep.subr.mxu0 0.0
        %585 = vmatpush1.msra.mxu0 0.0
        %586 = vmatprep.subr.mxu0 0.0
        %587 = vmatpush1.msra.mxu0 0.0
        %588 = vmatprep.subr.mxu0 0.0
        %589 = vmatpush1.msra.mxu0 0.0
        %590 = vmatprep.subr.mxu0 0.0
        %591 = vmatpush1.msra.mxu0 0.0
        %592 = vmatprep.subr.mxu0 0.0
        %593 = vmatpush1.msra.mxu0 0.0
        %594 = vmatprep.subr.mxu0 0.0
        %595 = vmatpush1.msra.mxu0 0.0
        %596 = vmatprep.subr.mxu0 0.0
        %597 = vmatpush1.msra.mxu0 0.0
        %598 = vmatprep.subr.mxu0 0.0
        %599 = vmatpush1.msra.mxu0 0.0
        %600 = vmatprep.subr.mxu0 0.0
        %601 = vmatpush1.msra.mxu0 0.0
        %602 = vmatprep.subr.mxu0 0.0
        %603 = vmatpush1.msra.mxu0 0.0
        %604 = vmatprep.subr.mxu0 0.0
        %605 = vmatpush1.msra.mxu0 0.0
        %606 = vmatprep.subr.mxu0 0.0
        %607 = vmatpush1.msra.mxu0 0.0
        %608 = vmatprep.subr.mxu0 0.0
        %609 = vmatpush1.msra.mxu0 0.0
        %610 = vmatprep.subr.mxu0 0.0
        %611 = vmatpush1.msra.mxu0 0.0
        %612 = vmatprep.subr.mxu0 0.0
        %613 = vmatpush1.msra.mxu0 0.0
        %614 = vmatprep.subr.mxu0 0.0
        %615 = vmatpush1.msra.mxu0 0.0
        %616 = vmatprep.subr.mxu0 0.0
        %617 = vmatpush1.msra.mxu0 0.0
        %618 = vmatprep.mubr.f32.mxu0 0.0
        %619 = vmatmul.mubr.f32.gmra.mrb[0].mxu0 %v549
        %v620 = vpop.f32.mrb[0].mxu0
        %v621 = vadd.f32 %v540, %v620
        %v622 = vpop.f32.mrb[0].mxu0
        %v623 = vadd.f32 %v540, %v622
        %624 = vmatprep.mubr.f32.mxu0 0.0
        %625 = vmatmul.mubr.f32.gmra.mrb[0].mxu0 %v552
        %v626 = vpop.f32.mrb[0].mxu0
        %v627 = vadd.f32 %v545, %v626
        %v628 = vpop.f32.mrb[0].mxu0
        %v629 = vadd.f32 %v545, %v628
        %630 = vdwg.mxu0
        %631 = vst [vmem:[%s260] sm:$0xff] %v621
        %632 = vst [vmem:[%s260 + $0x8] sm:$0xff] %v623
        %633 = vst [vmem:[%s260 + $0x10] sm:$0xff] %v627
        %634 = vst [vmem:[%s260 + $0x18] sm:$0xff] %v629
        %635 = vst [vmem:[%s260 + $0x20] sm:$0xff] %v417
        %636 = vst [vmem:[%s260 + $0x28] sm:$0xff] %v418
        %637 = vst [vmem:[%s260 + $0x30] sm:$0xff] %v419
        %638 = vst [vmem:[%s260 + $0x38] sm:$0xff] %v420
        %p639 = scmp.lt.s32.totalorder %s27, 0
        %s640 = ssub.s32 0, %s27
        %s641 = scalar_select %p639, %s640, %s27
        %s642 = sand.u32 %s641, 1
        %s643 = ssub.s32 0, %s642
        %s644 = scalar_select %p639, %s643, %s642
        %p645 = scmp.ne.s32.totalorder %s644, 0
        %p646 = scmp.lt.s32.totalorder %s644, 0
        %p647 = pnand %p646, %p645
        %p648 = pneg %p647
        %s649 = sadd.s32 %s644, 2
        %s650 = scalar_select %p648, %s649, %s644
        %p651 = scmp.eq.s32.totalorder %s650, 0
        // Predicated region
        $region49: #{tpu_custom_call.1} parent=39 // pred_check
          %p652 = pneg %p651
        $region50: #{tpu_custom_call.1} parent=39 // pred_check_branch
          %654 = sbr.rel (%p652) target = $region52
        $region51: #{tpu_custom_call.1} parent=39 // pred_region
          %655 = vst [vmem:[#allocation2] sm:$0xff] %v401
          %656 = vst [vmem:[#allocation2 + $0x8] sm:$0xff] %v403
          %657 = vst [vmem:[#allocation3] sm:$0xff] %v417
          %658 = vst [vmem:[#allocation3 + $0x8] sm:$0xff] %v418
          %659 = vst [vmem:[#allocation3 + $0x10] sm:$0xff] %v419
          %660 = vst [vmem:[#allocation3 + $0x18] sm:$0xff] %v420
        $region52: #{tpu_custom_call.1} parent=39 // pred_fallthru
          _
        %p661 = scmp.eq.s32.totalorder %s650, 1
        // Predicated region
        $region53: #{tpu_custom_call.1} parent=39 // pred_check
          %p662 = pneg %p661
        $region54: #{tpu_custom_call.1} parent=39 // pred_check_branch
          %664 = sbr.rel (%p662) target = $region56
        $region55: #{tpu_custom_call.1} parent=39 // pred_region
          %665 = vst [vmem:[%s427] sm:$0xff] %v401
          %666 = vst [vmem:[%s427 + $0x8] sm:$0xff] %v403
          %667 = vst [vmem:[%s430] sm:$0xff] %v417
          %668 = vst [vmem:[%s430 + $0x8] sm:$0xff] %v418
          %669 = vst [vmem:[%s430 + $0x10] sm:$0xff] %v419
          %670 = vst [vmem:[%s430 + $0x18] sm:$0xff] %v420
        $region56: #{tpu_custom_call.1} parent=39 // pred_fallthru
          _
        %s671 = sand.u32 %s156, 1
        %s672 = scalar_lea.sflag [#allocation6], %s671
        %s673 = sand.u32 %s156, 1
        %s674 = smul.addr %s673, 64
        %s675 = scalar_lea.vmem [#allocation7], %s674
        // Predicated region
        $region57: #{tpu_custom_call.1} parent=39 // pred_check
          %p676 = pneg %p166
        $region58: #{tpu_custom_call.1} parent=39 // pred_check_branch
          %678 = sbr.rel (%p676) target = $region60
        $region59: #{tpu_custom_call.1} parent=39 // pred_region
          %s679 = smul.u32 2, %s26
          %s681 = ssub.s32 1024, 1024
          %682 = vsyncadd %s672, %s681
          %s683 = smul.addr %s27, 8
          %s684 = sadd.s32 %s679, %s683
          %s685 = smul.addr %s684, 128
          %s686 = scalar_lea.hbm %s5, %s685
          %s687 = sshll.u32 %s675, 4
          %s688 = int_to_ptr.vmem [resolvable:$true] %s687
          %693 = dma.vmem_to_hbm [thread:$0]  %s688, 1024, %s686, %s672, 256, 256, 16
        $region60: #{tpu_custom_call.1} parent=39 // pred_fallthru
          _
      $region40: #{tpu_custom_call.1} parent=5 // pred_fallthru
        _
      %p694 = scmp.le.s32.totalorder 2, %s17
      // Predicated region
      $region61: #{tpu_custom_call.1} parent=5 // pred_check
        %p695 = pneg %p694
      $region62: #{tpu_custom_call.1} parent=5 // pred_check_branch
        %697 = sbr.rel (%p695) target = $region64
      $region63: #{tpu_custom_call.1} parent=5 // pred_region
        %s698 = ssub.s32 %s17, 2
        // Predicated region
        $region65: #{tpu_custom_call.1} parent=63 // pred_check
          %p699 = pneg %p172
        $region66: #{tpu_custom_call.1} parent=63 // pred_check_branch
          %701 = sbr.rel (%p699) target = $region68
        $region67: #{tpu_custom_call.1} parent=63 // pred_region
          %s702 = sand.u32 %s157, 1
          %s703 = scalar_lea.sflag [#allocation6], %s702
          %s704 = sand.u32 %s157, 1
          %s705 = smul.addr %s704, 64
          %s706 = scalar_lea.vmem [#allocation7], %s705
          %707 = dma.done %s703, 1024
        $region68: #{tpu_custom_call.1} parent=63 // pred_fallthru
          _
      $region64: #{tpu_custom_call.1} parent=5 // pred_fallthru
        _
    $region6: #{tpu_custom_call.1} parent=1 // loop_footer
      %s21 = sadd.s32 1, %s17
    $region7: #{tpu_custom_call.1} parent=1 // loop_footer_branch
      %16 = sbr.rel target = $region3
    $region8: #{tpu_custom_call.1} parent=1 // loop_exit
      _
    %708 = vsyncpa [#allocation5], 1
    %s709 = scalar_lea.sflag [#allocation5], 1
    %710 = vsyncpa %s709, 1
    %711 = vsyncpa [#allocation6], 1
    %s712 = scalar_lea.sflag [#allocation6], 1
    %713 = vsyncpa %s712, 1

</llo_original>
